<compile_context>
chip_gen: v7x
topology: tpu7x:2x2x1
jax: 0.10.0
libtpu: 0.0.40
codegen_flags: <defaults>
</compile_context>

<pallas_src>
import functools

import jax
import jax.numpy as jnp
from jax.experimental import pallas as pl
from jax.experimental.pallas import tpu as pltpu


def _round_up(x, m):
    return (x + m - 1) // m * m


def _attention_kernel(a1_ref, a2_ref,              # SMEM scalar PReLU slopes
                      rec_ref, cand_ref,           # (tm, E) f32 row tiles
                      w1_ref, b1_ref,              # (4E, H1) bf16, (1, H1) f32
                      w2_ref, b2_ref,              # (H1, H2) bf16, (1, H2) f32
                      w3t_ref, b3_ref,             # (1, H2) bf16,  (1, 1) f32
                      out_ref):                    # (1, 1, tm) f32
    r = rec_ref[...].astype(jnp.float32)
    c = cand_ref[...].astype(jnp.float32)
    sub = r - c
    prod = r * c

    # concat([r, c, r-c, r*c]) -> single lane-dense (tm, 4E) bf16 operand; one
    # K=4E MXU matmul instead of four K=E partial matmuls.
    u = jnp.concatenate([r, c, sub, prod], axis=-1).astype(jnp.bfloat16)

    h = jnp.dot(u, w1_ref[...], preferred_element_type=jnp.float32)
    h = h + b1_ref[...]
    h = jnp.where(h > 0, h, a1_ref[0] * h)          # PReLU (single shared slope)

    h = jnp.dot(h.astype(jnp.bfloat16), w2_ref[...],
                preferred_element_type=jnp.float32)
    h = h + b2_ref[...]
    h = jnp.where(h > 0, h, a2_ref[0] * h)          # PReLU

    # Final H2 -> 1 projection done transposed: contract (1,H2) with (tm,H2)
    # on their last dims -> (1, tm).  Result and HBM store are lane-dense.
    yt = jax.lax.dot_general(
        w3t_ref[...], h.astype(jnp.bfloat16),
        dimension_numbers=(((1,), (1,)), ((), ())),
        preferred_element_type=jnp.float32)
    yt = yt + b3_ref[...]                           # (1, tm) + (1, 1)
    out_ref[...] = jax.nn.sigmoid(yt)[None].astype(out_ref.dtype)


@functools.partial(jax.jit, static_argnames=("tm",))
def attention_layer_pallas(candidate, recent, params, *, tm=4096):
    """candidate, recent: (B, T, E) float32.  Returns (B, T, 1) float32."""
    B, T, E = candidate.shape
    M = B * T

    # Row tile: big enough to amortize per-grid-step overhead and sit near the
    # HBM roofline, small enough to double-buffer comfortably in VMEM.
    tm_eff = min(tm, _round_up(M, 8))
    grid_m = pl.cdiv(M, tm_eff)          # ragged last tile is handled by Pallas

    cand2d = candidate.reshape(M, E)
    rec2d = recent.reshape(M, E)

    # Pre-cast matmul weights to bf16 once (MXU-native on v5e/v6e/v7x);
    # biases / PReLU slopes stay f32, accumulation is f32.
    w1 = params["w1"].astype(jnp.bfloat16)           # (4E, H1)
    w2 = params["w2"].astype(jnp.bfloat16)           # (H1, H2)
    w3t = params["w3"].T.astype(jnp.bfloat16)        # (1, H2)
    b1 = params["b1"].astype(jnp.float32)
    b2 = params["b2"].astype(jnp.float32)
    b3 = params["b3"].astype(jnp.float32)
    a1 = params["a1"].astype(jnp.float32)
    a2 = params["a2"].astype(jnp.float32)
    H1 = w1.shape[1]
    H2 = w2.shape[1]

    row_spec = pl.BlockSpec((tm_eff, E), lambda i: (i, 0))
    full = lambda shape: pl.BlockSpec(shape, lambda i: (0,) * len(shape))
    smem_spec = pl.BlockSpec(memory_space=pltpu.SMEM)

    out = pl.pallas_call(
        _attention_kernel,
        out_shape=jax.ShapeDtypeStruct((grid_m, 1, tm_eff), jnp.float32),
        grid_spec=pltpu.PrefetchScalarGridSpec(
            num_scalar_prefetch=0,
            grid=(grid_m,),
            in_specs=[
                smem_spec,                 # a1 (PReLU slope 1)
                smem_spec,                 # a2 (PReLU slope 2)
                row_spec,                  # recent    (tm, E)
                row_spec,                  # candidate (tm, E)
                full((4 * E, H1)),         # W1 (bf16)
                full((1, H1)),             # b1
                full((H1, H2)),            # W2 (bf16)
                full((1, H2)),             # b2
                full((1, H2)),             # W3^T (bf16)
                full((1, 1)),              # b3
            ],
            out_specs=pl.BlockSpec((1, 1, tm_eff), lambda i: (i, 0, 0)),
        ),
        compiler_params=pltpu.CompilerParams(
            dimension_semantics=("parallel",)),
    )(a1, a2, rec2d, cand2d, w1, b1, w2, b2, w3t, b3)

    # (grid_m, 1, tm) -> flatten rows, drop tile padding, back to (B, T, 1).
    return out.reshape(grid_m * tm_eff)[:M].reshape(B, T, 1)


def init_params(key, embed_dim, hidden_dim_list=(32, 32)):
    """Deterministic init matching the module's parameter shapes."""
    dims = [4 * embed_dim] + list(hidden_dim_list) + [1]
    ks = jax.random.split(key, 2 * (len(dims) - 1))
    params = {}
    names = ["1", "2", "3"]
    for i, (din, dout) in enumerate(zip(dims[:-1], dims[1:])):
        bound = 1.0 / jnp.sqrt(float(din))
        params[f"w{names[i]}"] = jax.random.uniform(
            ks[2 * i], (din, dout), jnp.float32, -bound, bound)
        params[f"b{names[i]}"] = jax.random.uniform(
            ks[2 * i + 1], (1, dout), jnp.float32, -bound, bound)
    # PReLU single-parameter slopes, PyTorch default init = 0.25
    params["a1"] = jnp.full((1,), 0.25, jnp.float32)
    params["a2"] = jnp.full((1,), 0.25, jnp.float32)
    return params


def attention_layer_ref(candidate, recent, params):
    """Pure-JAX f32 reference of the PyTorch forward."""
    sub = recent - candidate
    prod = recent * candidate
    u = jnp.concatenate([recent, candidate, sub, prod], axis=2)
    h = u @ params["w1"] + params["b1"]
    h = jnp.where(h > 0, h, params["a1"][0] * h)
    h = h @ params["w2"] + params["b2"]
    h = jnp.where(h > 0, h, params["a2"][0] * h)
    y = h @ params["w3"] + params["b3"]
    return jax.nn.sigmoid(y)


if __name__ == "__main__":
    key = jax.random.PRNGKey(0)
    k_c, k_r, k_p, k_c2, k_r2 = jax.random.split(key, 5)

    # Small shape consistent with the module (batch=2, seq=8, embed_dim=32).
    B, T, E = 2, 8, 32
    candidate = jax.random.normal(k_c, (B, T, E), jnp.float32)
    recent = jax.random.normal(k_r, (B, T, E), jnp.float32)
    params = init_params(k_p, E, hidden_dim_list=(32, 32))

    out = jax.block_until_ready(attention_layer_pallas(candidate, recent, params))
    ref = attention_layer_ref(candidate, recent, params)
    assert out.shape == (B, T, 1)
    # bf16 matmul path: tolerance loosened vs f32 reference.
    assert jnp.allclose(out, ref, atol=2e-2, rtol=2e-2), "mismatch vs reference (small)"

    # Second shape exercising the tiled/pipelined path: multiple grid steps,
    # a ragged last row tile, and lane-dense (1, tm) output stores.
    B2, T2 = 4, 300                      # M = 1200 rows, tm=512 -> 3 tiles
    cand2 = jax.random.normal(k_c2, (B2, T2, E), jnp.float32)
    rec2 = jax.random.normal(k_r2, (B2, T2, E), jnp.float32)
    out2 = jax.block_until_ready(
        attention_layer_pallas(cand2, rec2, params, tm=512))
    ref2 = attention_layer_ref(cand2, rec2, params)
    assert out2.shape == (B2, T2, 1)
    assert jnp.allclose(out2, ref2, atol=2e-2, rtol=2e-2), "mismatch vs reference (tiled)"

    print("KERNEL_OK")
</pallas_src>

<mosaic_0001>
module attributes {stable_mosaic.version = 11 : i64} {
  func.func @_attention_kernel(%arg0: i32, %arg1: memref<1xf32, #tpu.memory_space<smem>>, %arg2: memref<1xf32, #tpu.memory_space<smem>>, %arg3: memref<16x32xf32, #tpu.memory_space<vmem>>, %arg4: memref<16x32xf32, #tpu.memory_space<vmem>>, %arg5: memref<128x32xbf16, #tpu.memory_space<vmem>>, %arg6: memref<1x32xf32, #tpu.memory_space<vmem>>, %arg7: memref<32x32xbf16, #tpu.memory_space<vmem>>, %arg8: memref<1x32xf32, #tpu.memory_space<vmem>>, %arg9: memref<1x32xbf16, #tpu.memory_space<vmem>>, %arg10: memref<1x1xf32, #tpu.memory_space<vmem>>, %arg11: memref<1x1x16xf32, #tpu.memory_space<vmem>>) attributes {dimension_semantics = [#tpu.dimension_semantics<parallel>], iteration_bounds = array<i64: 1>, scalar_prefetch = 0 : i64, scratch_operands = 0 : i64, tpu.core_type = #tpu.core_type<tc>, window_params = [{transform_indices = @transform_0, window_bounds = array<i64: 1>}, {transform_indices = @transform_1, window_bounds = array<i64: 1>}, {transform_indices = @transform_2, window_bounds = array<i64: 16, 32>}, {transform_indices = @transform_3, window_bounds = array<i64: 16, 32>}, {pipeline_mode = #tpu.pipeline_mode<synchronous>, transform_indices = @transform_4, window_bounds = array<i64: 128, 32>}, {pipeline_mode = #tpu.pipeline_mode<synchronous>, transform_indices = @transform_5, window_bounds = array<i64: 1, 32>}, {pipeline_mode = #tpu.pipeline_mode<synchronous>, transform_indices = @transform_6, window_bounds = array<i64: 32, 32>}, {pipeline_mode = #tpu.pipeline_mode<synchronous>, transform_indices = @transform_7, window_bounds = array<i64: 1, 32>}, {pipeline_mode = #tpu.pipeline_mode<synchronous>, transform_indices = @transform_8, window_bounds = array<i64: 1, 32>}, {pipeline_mode = #tpu.pipeline_mode<synchronous>, transform_indices = @transform_9, window_bounds = array<i64: 1, 1>}, {transform_indices = @transform_10, window_bounds = array<i64: 1, 1, 16>}]} {
    %c0 = arith.constant 0 : index
    %c0_0 = arith.constant 0 : index
    %0 = vector.load %arg3[%c0, %c0_0] : memref<16x32xf32, #tpu.memory_space<vmem>>, vector<16x32xf32>
    %c0_1 = arith.constant 0 : index
    %c0_2 = arith.constant 0 : index
    %1 = vector.load %arg4[%c0_1, %c0_2] : memref<16x32xf32, #tpu.memory_space<vmem>>, vector<16x32xf32>
    %2 = arith.subf %0, %1 : vector<16x32xf32>
    %3 = arith.mulf %0, %1 : vector<16x32xf32>
    %4 = tpu.concatenate %0, %1, %2, %3 in 1 : vector<16x32xf32>, vector<16x32xf32>, vector<16x32xf32>, vector<16x32xf32> -> vector<16x128xf32>
    %5 = arith.truncf %4 : vector<16x128xf32> to vector<16x128xbf16>
    %c0_3 = arith.constant 0 : index
    %c0_4 = arith.constant 0 : index
    %6 = vector.load %arg5[%c0_3, %c0_4] : memref<128x32xbf16, #tpu.memory_space<vmem>>, vector<128x32xbf16>
    %cst = arith.constant dense<0.000000e+00> : vector<16x32xf32>
    %7 = tpu.matmul %5, %6, %cst {dimension_numbers = #tpu.dot_dimension_numbers<[1], [0], [0], [1], [0, 0, 1, 1], [], []>} : vector<16x128xbf16>, vector<128x32xbf16>, vector<16x32xf32> -> vector<16x32xf32>
    %c0_5 = arith.constant 0 : index
    %c0_6 = arith.constant 0 : index
    %8 = vector.load %arg6[%c0_5, %c0_6] : memref<1x32xf32, #tpu.memory_space<vmem>>, vector<1x32xf32>
    %9 = vector.broadcast %8 : vector<1x32xf32> to vector<16x32xf32>
    %10 = arith.addf %7, %9 : vector<16x32xf32>
    %cst_7 = arith.constant 0.000000e+00 : f32
    %11 = vector.broadcast %cst_7 : f32 to vector<16x32xf32>
    %12 = arith.cmpf ogt, %10, %11 : vector<16x32xf32>
    %c0_8 = arith.constant 0 : index
    %13 = memref.load %arg1[%c0_8] : memref<1xf32, #tpu.memory_space<smem>>
    %14 = vector.broadcast %13 : f32 to vector<16x32xf32>
    %15 = arith.mulf %14, %10 : vector<16x32xf32>
    %16 = arith.select %12, %10, %15 : vector<16x32xi1>, vector<16x32xf32>
    %17 = arith.truncf %16 : vector<16x32xf32> to vector<16x32xbf16>
    %c0_9 = arith.constant 0 : index
    %c0_10 = arith.constant 0 : index
    %18 = vector.load %arg7[%c0_9, %c0_10] : memref<32x32xbf16, #tpu.memory_space<vmem>>, vector<32x32xbf16>
    %cst_11 = arith.constant dense<0.000000e+00> : vector<16x32xf32>
    %19 = tpu.matmul %17, %18, %cst_11 {dimension_numbers = #tpu.dot_dimension_numbers<[1], [0], [0], [1], [0, 0, 1, 1], [], []>} : vector<16x32xbf16>, vector<32x32xbf16>, vector<16x32xf32> -> vector<16x32xf32>
    %c0_12 = arith.constant 0 : index
    %c0_13 = arith.constant 0 : index
    %20 = vector.load %arg8[%c0_12, %c0_13] : memref<1x32xf32, #tpu.memory_space<vmem>>, vector<1x32xf32>
    %21 = vector.broadcast %20 : vector<1x32xf32> to vector<16x32xf32>
    %22 = arith.addf %19, %21 : vector<16x32xf32>
    %cst_14 = arith.constant 0.000000e+00 : f32
    %23 = vector.broadcast %cst_14 : f32 to vector<16x32xf32>
    %24 = arith.cmpf ogt, %22, %23 : vector<16x32xf32>
    %c0_15 = arith.constant 0 : index
    %25 = memref.load %arg2[%c0_15] : memref<1xf32, #tpu.memory_space<smem>>
    %26 = vector.broadcast %25 : f32 to vector<16x32xf32>
    %27 = arith.mulf %26, %22 : vector<16x32xf32>
    %28 = arith.select %24, %22, %27 : vector<16x32xi1>, vector<16x32xf32>
    %c0_16 = arith.constant 0 : index
    %c0_17 = arith.constant 0 : index
    %29 = vector.load %arg9[%c0_16, %c0_17] : memref<1x32xbf16, #tpu.memory_space<vmem>>, vector<1x32xbf16>
    %30 = arith.truncf %28 : vector<16x32xf32> to vector<16x32xbf16>
    %cst_18 = arith.constant dense<0.000000e+00> : vector<1x16xf32>
    %31 = tpu.matmul %29, %30, %cst_18 {dimension_numbers = #tpu.dot_dimension_numbers<[1], [1], [0], [0], [0, 0, 1, 0], [], []>} : vector<1x32xbf16>, vector<16x32xbf16>, vector<1x16xf32> -> vector<1x16xf32>
    %c0_19 = arith.constant 0 : index
    %c0_20 = arith.constant 0 : index
    %32 = vector.load %arg10[%c0_19, %c0_20] : memref<1x1xf32, #tpu.memory_space<vmem>>, vector<1x1xf32>
    %33 = vector.broadcast %32 : vector<1x1xf32> to vector<1x16xf32>
    %34 = arith.addf %31, %33 : vector<1x16xf32>
    %35 = arith.negf %34 : vector<1x16xf32>
    %36 = math.exp %35 : vector<1x16xf32>
    %cst_21 = arith.constant 1.000000e+00 : f32
    %37 = vector.broadcast %cst_21 : f32 to vector<1x16xf32>
    %38 = arith.addf %37, %36 : vector<1x16xf32>
    %39 = arith.divf %37, %38 : vector<1x16xf32>
    %40 = vector.shape_cast %39 : vector<1x16xf32> to vector<1x1x16xf32>
    %c0_22 = arith.constant 0 : index
    %c0_23 = arith.constant 0 : index
    %c0_24 = arith.constant 0 : index
    %41 = vector.load %arg11[%c0_22, %c0_23, %c0_24] : memref<1x1x16xf32, #tpu.memory_space<vmem>>, vector<1x1x16xf32>
    tpu.vector_store %arg11[%c0_22, %c0_23, %c0_24], %40 {strides = array<i32>} : memref<1x1x16xf32, #tpu.memory_space<vmem>>, vector<1x1x16xf32>,
    return
  }
  func.func @transform_0(%arg0: i32) -> i32 {
    %c0_i32 = arith.constant 0 : i32
    %c0_i32_0 = arith.constant 0 : i32
    return %c0_i32 : i32
  }
  func.func @transform_1(%arg0: i32) -> i32 {
    %c0_i32 = arith.constant 0 : i32
    %c0_i32_0 = arith.constant 0 : i32
    return %c0_i32 : i32
  }
  func.func @transform_2(%arg0: i32) -> (i32, i32) {
    %c0_i32 = arith.constant 0 : i32
    %c0_i32_0 = arith.constant 0 : i32
    return %arg0, %c0_i32 : i32, i32
  }
  func.func @transform_3(%arg0: i32) -> (i32, i32) {
    %c0_i32 = arith.constant 0 : i32
    %c0_i32_0 = arith.constant 0 : i32
    return %arg0, %c0_i32 : i32, i32
  }
  func.func @transform_4(%arg0: i32) -> (i32, i32) {
    %c0_i32 = arith.constant 0 : i32
    %c0_i32_0 = arith.constant 0 : i32
    %c0_i32_1 = arith.constant 0 : i32
    return %c0_i32, %c0_i32_0 : i32, i32
  }
  func.func @transform_5(%arg0: i32) -> (i32, i32) {
    %c0_i32 = arith.constant 0 : i32
    %c0_i32_0 = arith.constant 0 : i32
    %c0_i32_1 = arith.constant 0 : i32
    return %c0_i32, %c0_i32_0 : i32, i32
  }
  func.func @transform_6(%arg0: i32) -> (i32, i32) {
    %c0_i32 = arith.constant 0 : i32
    %c0_i32_0 = arith.constant 0 : i32
    %c0_i32_1 = arith.constant 0 : i32
    return %c0_i32, %c0_i32_0 : i32, i32
  }
  func.func @transform_7(%arg0: i32) -> (i32, i32) {
    %c0_i32 = arith.constant 0 : i32
    %c0_i32_0 = arith.constant 0 : i32
    %c0_i32_1 = arith.constant 0 : i32
    return %c0_i32, %c0_i32_0 : i32, i32
  }
  func.func @transform_8(%arg0: i32) -> (i32, i32) {
    %c0_i32 = arith.constant 0 : i32
    %c0_i32_0 = arith.constant 0 : i32
    %c0_i32_1 = arith.constant 0 : i32
    return %c0_i32, %c0_i32_0 : i32, i32
  }
  func.func @transform_9(%arg0: i32) -> (i32, i32) {
    %c0_i32 = arith.constant 0 : i32
    %c0_i32_0 = arith.constant 0 : i32
    %c0_i32_1 = arith.constant 0 : i32
    return %c0_i32, %c0_i32_0 : i32, i32
  }
  func.func @transform_10(%arg0: i32) -> (i32, i32, i32) {
    %c0_i32 = arith.constant 0 : i32
    %c0_i32_0 = arith.constant 0 : i32
    %c0_i32_1 = arith.constant 0 : i32
    return %arg0, %c0_i32, %c0_i32_0 : i32, i32, i32
  }
}

</mosaic_0001>

<llo_original>
// kernel: attention_layer_pallas.1
$region0: #{attention_layer_pallas.1}
  #allocation0 [shape = 'u32[]', space=smem, size = 0x4, offset = 0x4, fixed_abs, tag = 'smem constant byte address 0x4 - core index']
  #allocation1 [shape = 'u32[144,128]{1,0:T(1,128)}', space=vmem, size = 0x12000, scoped, tag = 'internal scratch']
  #allocation2 [shape = 'f32[1]{0:T(128)S(6)}', space=smem, size = 0x200, scoped, tag = 'scoped memory for attention_layer_pallas.1']
  #allocation3 [shape = 'f32[1]{0:T(128)S(6)}', space=smem, size = 0x200, scoped, tag = 'scoped memory for attention_layer_pallas.1']
  #allocation4 [shape = 'f32[1,1]{1,0:T(1,128)S(1)}', space=vmem, size = 0x200, scoped, tag = 'scoped memory for attention_layer_pallas.1']
  %s0 = inlined_call_operand.<no memory space> [shape: f32[1], index: 0, kind: input, shape index: {}]
  %s1 = inlined_call_operand.<no memory space> [shape: f32[1], index: 1, kind: input, shape index: {}]
  %s2 = inlined_call_operand.vmem [shape: f32[16,32], index: 2, kind: input, shape index: {}]
  %s3 = inlined_call_operand.vmem [shape: f32[16,32], index: 3, kind: input, shape index: {}]
  %s4 = inlined_call_operand.vmem [shape: bf16[128,32], index: 4, kind: input, shape index: {}]
  %s5 = inlined_call_operand.vmem [shape: f32[1,32], index: 5, kind: input, shape index: {}]
  %s6 = inlined_call_operand.vmem [shape: bf16[32,32], index: 6, kind: input, shape index: {}]
  %s7 = inlined_call_operand.vmem [shape: f32[1,32], index: 7, kind: input, shape index: {}]
  %s8 = inlined_call_operand.vmem [shape: bf16[1,32], index: 8, kind: input, shape index: {}]
  %s9 = inlined_call_operand.<no memory space> [shape: f32[1,1], index: 9, kind: input, shape index: {}]
  %s10 = inlined_call_operand.vmem [shape: f32[1,1,16], index: 10, kind: output, shape index: {}]
  %s11 = sld [smem:[#allocation0]]
  $region50: #{attention_layer_pallas.1} parent=0
    _
  %s13 = ssub.s32 1, %s11
  %s14 = scalar_select 0, %s13, %s11
  %15 = sst [smem:[#allocation2]] %s0
  %16 = sst [smem:[#allocation3]] %s1
  %v17 = vstv %s9
  %18 = vst [vmem:[#allocation4] sm:$0x1] %v17
  // Predicated region
  $region2: #{attention_layer_pallas.1} parent=0 // pred_check
    _
  $region3: #{attention_layer_pallas.1} parent=0 // pred_check_branch
    %20 = sbr.rel (0) target = $region5
  $region4: #{attention_layer_pallas.1} parent=0 // pred_region
    _
  $region5: #{attention_layer_pallas.1} parent=0 // pred_fallthru
    _
  // Predicated region
  $region6: #{attention_layer_pallas.1} parent=0 // pred_check
    _
  $region7: #{attention_layer_pallas.1} parent=0 // pred_check_branch
    %22 = sbr.rel (0) target = $region9
  $region8: #{attention_layer_pallas.1} parent=0 // pred_region
    _
  $region9: #{attention_layer_pallas.1} parent=0 // pred_fallthru
    _
  // Predicated region
  $region10: #{attention_layer_pallas.1} parent=0 // pred_check
    _
  $region11: #{attention_layer_pallas.1} parent=0 // pred_check_branch
    %24 = sbr.rel (0) target = $region13
  $region12: #{attention_layer_pallas.1} parent=0 // pred_region
    _
  $region13: #{attention_layer_pallas.1} parent=0 // pred_fallthru
    _
  // Predicated region
  $region14: #{attention_layer_pallas.1} parent=0 // pred_check
    _
  $region15: #{attention_layer_pallas.1} parent=0 // pred_check_branch
    %26 = sbr.rel (0) target = $region17
  $region16: #{attention_layer_pallas.1} parent=0 // pred_region
    _
  $region17: #{attention_layer_pallas.1} parent=0 // pred_fallthru
    _
  // Predicated region
  $region18: #{attention_layer_pallas.1} parent=0 // pred_check
    _
  $region19: #{attention_layer_pallas.1} parent=0 // pred_check_branch
    %28 = sbr.rel (0) target = $region21
  $region20: #{attention_layer_pallas.1} parent=0 // pred_region
    _
  $region21: #{attention_layer_pallas.1} parent=0 // pred_fallthru
    _
  // Predicated region
  $region22: #{attention_layer_pallas.1} parent=0 // pred_check
    _
  $region23: #{attention_layer_pallas.1} parent=0 // pred_check_branch
    %30 = sbr.rel (0) target = $region25
  $region24: #{attention_layer_pallas.1} parent=0 // pred_region
    _
  $region25: #{attention_layer_pallas.1} parent=0 // pred_fallthru
    _
  // Predicated region
  $region26: #{attention_layer_pallas.1} parent=0 // pred_check
    _
  $region27: #{attention_layer_pallas.1} parent=0 // pred_check_branch
    %32 = sbr.rel (0) target = $region29
  $region28: #{attention_layer_pallas.1} parent=0 // pred_region
    _
  $region29: #{attention_layer_pallas.1} parent=0 // pred_fallthru
    _
  // Predicated region
  $region30: #{attention_layer_pallas.1} parent=0 // pred_check
    _
  $region31: #{attention_layer_pallas.1} parent=0 // pred_check_branch
    %34 = sbr.rel (0) target = $region33
  $region32: #{attention_layer_pallas.1} parent=0 // pred_region
    _
  $region33: #{attention_layer_pallas.1} parent=0 // pred_fallthru
    _
  // Predicated region
  $region34: #{attention_layer_pallas.1} parent=0 // pred_check
    _
  $region35: #{attention_layer_pallas.1} parent=0 // pred_check_branch
    %36 = sbr.rel (0) target = $region37
  $region36: #{attention_layer_pallas.1} parent=0 // pred_region
    _
  $region37: #{attention_layer_pallas.1} parent=0 // pred_fallthru
    _
  // Predicated region
  $region38: #{attention_layer_pallas.1} parent=0 // pred_check
    _
  $region39: #{attention_layer_pallas.1} parent=0 // pred_check_branch
    %38 = sbr.rel (0) target = $region41
  $region40: #{attention_layer_pallas.1} parent=0 // pred_region
    _
  $region41: #{attention_layer_pallas.1} parent=0 // pred_fallthru
    _
  %v40 = vld [vmem:[%s2] sm:$0xff]
  %v41 = vld [vmem:[%s2 + $0x8] sm:$0xff]
  %v42 = vld [vmem:[%s3] sm:$0xff]
  %v43 = vld [vmem:[%s3 + $0x8] sm:$0xff]
  %v44 = vsub.f32 %v40, %v42
  %v45 = vsub.f32 %v41, %v43
  %v46 = vmul.f32 %v40, %v42
  %v47 = vmul.f32 %v41, %v43
  %50 = vrot.lane.b32.xlu0 %v42, 32
  %v51 = vpop.permute.xlu0 %50
  %52 = vrot.lane.b32.xlu0 %v43, 32
  %v53 = vpop.permute.xlu0 %52
  %58 = vrot.lane.b32.xlu0 %v44, 64
  %v59 = vpop.permute.xlu0 %58
  %60 = vrot.lane.b32.xlu0 %v45, 64
  %v61 = vpop.permute.xlu0 %60
  %66 = vrot.lane.b32.xlu0 %v46, 96
  %v67 = vpop.permute.xlu0 %66
  %68 = vrot.lane.b32.xlu0 %v47, 96
  %v69 = vpop.permute.xlu0 %68
  %vm72 = vcmask 261120
  %v73 = vsel %vm72, %v40, %v51
  %v74 = vsel %vm72, %v41, %v53
  %vm75 = vcmask 523264
  %v76 = vsel %vm75, %v73, %v59
  %v77 = vsel %vm75, %v74, %v61
  %vm78 = vcmask 785408
  %v79 = vsel %vm78, %v76, %v67
  %v80 = vsel %vm78, %v77, %v69
  %v81 = vpack.c.bf16 %v80, %v79
  %v82 = vld [vmem:[%s4] sm:$0xf]
  %v83 = vld [vmem:[%s4 + $0x4] sm:$0xf]
  %v84 = vld [vmem:[%s4 + $0x8] sm:$0xf]
  %v85 = vld [vmem:[%s4 + $0xc] sm:$0xf]
  %v86 = vld [vmem:[%s4 + $0x10] sm:$0xf]
  %v87 = vld [vmem:[%s4 + $0x14] sm:$0xf]
  %v88 = vld [vmem:[%s4 + $0x18] sm:$0xf]
  %v89 = vld [vmem:[%s4 + $0x1c] sm:$0xf]
  %v90 = vld [vmem:[%s4 + $0x20] sm:$0xf]
  %v91 = vld [vmem:[%s4 + $0x24] sm:$0xf]
  %v92 = vld [vmem:[%s4 + $0x28] sm:$0xf]
  %v93 = vld [vmem:[%s4 + $0x2c] sm:$0xf]
  %v94 = vld [vmem:[%s4 + $0x30] sm:$0xf]
  %v95 = vld [vmem:[%s4 + $0x34] sm:$0xf]
  %v96 = vld [vmem:[%s4 + $0x38] sm:$0xf]
  %v97 = vld [vmem:[%s4 + $0x3c] sm:$0xf]
  %v98 = vld [vmem:[%s5] sm:$0x1]
  %v100 = vlaneseq
  %v101 = vshrl.u32 %v100, 7
  %v102 = vsub.s32 0, %v101
  %v103 = vrot.slane %v98, %v102
  %v121 = vunpack.c.l.b16 %v82
  %v122 = vunpack.c.l.b16 %v83
  %v123 = vunpack.c.l.b16 %v84
  %v124 = vunpack.c.l.b16 %v85
  %v125 = vunpack.c.l.b16 %v86
  %v126 = vunpack.c.l.b16 %v87
  %v127 = vunpack.c.l.b16 %v88
  %v128 = vunpack.c.l.b16 %v89
  %v129 = vunpack.c.l.b16 %v90
  %v130 = vunpack.c.l.b16 %v91
  %v131 = vunpack.c.l.b16 %v92
  %v132 = vunpack.c.l.b16 %v93
  %v133 = vunpack.c.l.b16 %v94
  %v134 = vunpack.c.l.b16 %v95
  %v135 = vunpack.c.l.b16 %v96
  %v136 = vunpack.c.l.b16 %v97
  %v137 = vpack.c.b16 %v122, %v121
  %v138 = vpack.c.b16 %v124, %v123
  %v139 = vpack.c.b16 %v126, %v125
  %v140 = vpack.c.b16 %v128, %v127
  %v141 = vpack.c.b16 %v130, %v129
  %v142 = vpack.c.b16 %v132, %v131
  %v143 = vpack.c.b16 %v134, %v133
  %v144 = vpack.c.b16 %v136, %v135
  %153 = vmatprep.subr.bf16.mxu0 0
  %154 = vmatpush1.bf16.msra.mxu0 %v137
  %155 = vmatprep.subr.bf16.mxu0 0
  %156 = vmatpush1.bf16.msra.mxu0 %v138
  %157 = vmatprep.subr.bf16.mxu0 0
  %158 = vmatpush1.bf16.msra.mxu0 %v139
  %159 = vmatprep.subr.bf16.mxu0 0
  %160 = vmatpush1.bf16.msra.mxu0 %v140
  %161 = vmatprep.subr.bf16.mxu0 0
  %162 = vmatpush1.bf16.msra.mxu0 %v141
  %163 = vmatprep.subr.bf16.mxu0 0
  %164 = vmatpush1.bf16.msra.mxu0 %v142
  %165 = vmatprep.subr.bf16.mxu0 0
  %166 = vmatpush1.bf16.msra.mxu0 %v143
  %167 = vmatprep.subr.bf16.mxu0 0
  %168 = vmatpush1.bf16.msra.mxu0 %v144
  %169 = vmatprep.subr.bf16.mxu0 0
  %170 = vmatpush1.bf16.msra.mxu0 0
  %171 = vmatprep.subr.bf16.mxu0 0
  %172 = vmatpush1.bf16.msra.mxu0 0
  %173 = vmatprep.subr.bf16.mxu0 0
  %174 = vmatpush1.bf16.msra.mxu0 0
  %175 = vmatprep.subr.bf16.mxu0 0
  %176 = vmatpush1.bf16.msra.mxu0 0
  %177 = vmatprep.subr.bf16.mxu0 0
  %178 = vmatpush1.bf16.msra.mxu0 0
  %179 = vmatprep.subr.bf16.mxu0 0
  %180 = vmatpush1.bf16.msra.mxu0 0
  %181 = vmatprep.subr.bf16.mxu0 0
  %182 = vmatpush1.bf16.msra.mxu0 0
  %183 = vmatprep.subr.bf16.mxu0 0
  %184 = vmatpush1.bf16.msra.mxu0 0
  %185 = vmatprep.mubr.bf16.mxu0 0
  %186 = vmatmul.mubr.bf16.gmra.mrb[0].mxu0 %v81
  %v187 = vpop.f32.mrb[0].mxu0
  %v188 = vadd.f32 %v103, %v187
  %v189 = vpop.f32.mrb[0].mxu0
  %v190 = vpop.f32.mrb[0].mxu0
  %v191 = vadd.f32 %v103, %v190
  %v192 = vpop.f32.mrb[0].mxu0
  %193 = vdwg.mxu0
  %vm194 = vcmp.gt.f32.partialorder %v188, 0.0
  %vm195 = vcmp.gt.f32.partialorder %v191, 0.0
  %s196 = sld [smem:[#allocation2]]
  %v197 = vstv %s196
  %v198 = vmul.f32 %v197, %v188
  %v199 = vmul.f32 %v197, %v191
  %v200 = vsel %vm194, %v188, %v198
  %v201 = vsel %vm195, %v191, %v199
  %v202 = vpack.c.bf16 %v201, %v200
  %v203 = vld [vmem:[%s6] sm:$0xf]
  %v204 = vld [vmem:[%s6 + $0x4] sm:$0xf]
  %v205 = vld [vmem:[%s6 + $0x8] sm:$0xf]
  %v206 = vld [vmem:[%s6 + $0xc] sm:$0xf]
  %v207 = vld [vmem:[%s7] sm:$0x1]
  %v209 = vlaneseq
  %v210 = vshrl.u32 %v209, 7
  %v211 = vsub.s32 0, %v210
  %v212 = vrot.slane %v207, %v211
  %v218 = vunpack.c.l.b16 %v203
  %v219 = vunpack.c.l.b16 %v204
  %v220 = vunpack.c.l.b16 %v205
  %v221 = vunpack.c.l.b16 %v206
  %v222 = vpack.c.b16 %v219, %v218
  %v223 = vpack.c.b16 %v221, %v220
  %v227 = vsel %vm72, %v202, 0
  %229 = vmatprep.subr.bf16.mxu0 0
  %230 = vmatpush1.bf16.msra.mxu0 %v222
  %231 = vmatprep.subr.bf16.mxu0 0
  %232 = vmatpush1.bf16.msra.mxu0 %v223
  %233 = vmatprep.subr.bf16.mxu0 0
  %234 = vmatpush1.bf16.msra.mxu0 0
  %235 = vmatprep.subr.bf16.mxu0 0
  %236 = vmatpush1.bf16.msra.mxu0 0
  %237 = vmatprep.subr.bf16.mxu0 0
  %238 = vmatpush1.bf16.msra.mxu0 0
  %239 = vmatprep.subr.bf16.mxu0 0
  %240 = vmatpush1.bf16.msra.mxu0 0
  %241 = vmatprep.subr.bf16.mxu0 0
  %242 = vmatpush1.bf16.msra.mxu0 0
  %243 = vmatprep.subr.bf16.mxu0 0
  %244 = vmatpush1.bf16.msra.mxu0 0
  %245 = vmatprep.subr.bf16.mxu0 0
  %246 = vmatpush1.bf16.msra.mxu0 0
  %247 = vmatprep.subr.bf16.mxu0 0
  %248 = vmatpush1.bf16.msra.mxu0 0
  %249 = vmatprep.subr.bf16.mxu0 0
  %250 = vmatpush1.bf16.msra.mxu0 0
  %251 = vmatprep.subr.bf16.mxu0 0
  %252 = vmatpush1.bf16.msra.mxu0 0
  %253 = vmatprep.subr.bf16.mxu0 0
  %254 = vmatpush1.bf16.msra.mxu0 0
  %255 = vmatprep.subr.bf16.mxu0 0
  %256 = vmatpush1.bf16.msra.mxu0 0
  %257 = vmatprep.subr.bf16.mxu0 0
  %258 = vmatpush1.bf16.msra.mxu0 0
  %259 = vmatprep.subr.bf16.mxu0 0
  %260 = vmatpush1.bf16.msra.mxu0 0
  %261 = vmatprep.mubr.bf16.mxu0 0
  %262 = vmatmul.mubr.bf16.gmra.mrb[0].mxu0 %v227
  %v263 = vpop.f32.mrb[0].mxu0
  %v264 = vadd.f32 %v212, %v263
  %v265 = vpop.f32.mrb[0].mxu0
  %v266 = vpop.f32.mrb[0].mxu0
  %v267 = vadd.f32 %v212, %v266
  %v268 = vpop.f32.mrb[0].mxu0
  %269 = vdwg.mxu0
  %vm270 = vcmp.gt.f32.partialorder %v264, 0.0
  %vm271 = vcmp.gt.f32.partialorder %v267, 0.0
  %s272 = sld [smem:[#allocation3]]
  %v273 = vstv %s272
  %v274 = vmul.f32 %v273, %v264
  %v275 = vmul.f32 %v273, %v267
  %v276 = vsel %vm270, %v264, %v274
  %v277 = vsel %vm271, %v267, %v275
  %v278 = vld [vmem:[%s8] sm:$0x1]
  %v279 = vpack.c.bf16 %v277, %v276
  %v280 = vld [vmem:[#allocation4] sm:$0x1]
  %282 = vset.pattern.permute.xlu0 0
  %283 = vperm.xlu0 %282, %v280
  %v284 = vpop.permute.xlu0 %283
  %v286 = vlaneseq
  %v287 = vshrl.u32 %v286, 7
  %v288 = vsub.s32 0, %v287
  %v289 = vrot.slane %v284, %v288
  %v291 = vsel %vm72, %v278, 0
  %v294 = vsel %vm72, %v279, 0
  %296 = vmatprep.subr.bf16.mxu0 0
  %297 = vmatpush1.bf16.xpose.msra.mxu0 %v294
  %298 = vmatprep.subr.bf16.mxu0 0
  %299 = vmatpush1.bf16.xpose.msra.mxu0 0
  %300 = vmatprep.subr.bf16.mxu0 0
  %301 = vmatpush1.bf16.xpose.msra.mxu0 0
  %302 = vmatprep.subr.bf16.mxu0 0
  %303 = vmatpush1.bf16.xpose.msra.mxu0 0
  %304 = vmatprep.subr.bf16.mxu0 0
  %305 = vmatpush1.bf16.xpose.msra.mxu0 0
  %306 = vmatprep.subr.bf16.mxu0 0
  %307 = vmatpush1.bf16.xpose.msra.mxu0 0
  %308 = vmatprep.subr.bf16.mxu0 0
  %309 = vmatpush1.bf16.xpose.msra.mxu0 0
  %310 = vmatprep.subr.bf16.mxu0 0
  %311 = vmatpush1.bf16.xpose.msra.mxu0 0
  %312 = vmatprep.subr.bf16.mxu0 0
  %313 = vmatpush1.bf16.xpose.msra.mxu0 0
  %314 = vmatprep.subr.bf16.mxu0 0
  %315 = vmatpush1.bf16.xpose.msra.mxu0 0
  %316 = vmatprep.subr.bf16.mxu0 0
  %317 = vmatpush1.bf16.xpose.msra.mxu0 0
  %318 = vmatprep.subr.bf16.mxu0 0
  %319 = vmatpush1.bf16.xpose.msra.mxu0 0
  %320 = vmatprep.subr.bf16.mxu0 0
  %321 = vmatpush1.bf16.xpose.msra.mxu0 0
  %322 = vmatprep.subr.bf16.mxu0 0
  %323 = vmatpush1.bf16.xpose.msra.mxu0 0
  %324 = vmatprep.subr.bf16.mxu0 0
  %325 = vmatpush1.bf16.xpose.msra.mxu0 0
  %326 = vmatprep.subr.bf16.mxu0 0
  %327 = vmatpush1.bf16.xpose.msra.mxu0 0
  %328 = vmatprep.mubr.bf16.mxu0 0
  %329 = vmatmul.mubr.bf16.gmra.mrb[0].mxu0 %v291
  %v330 = vpop.f32.mrb[0].mxu0
  %v331 = vadd.f32 %v289, %v330
  %v332 = vpop.f32.mrb[0].mxu0
  %v333 = vpop.f32.mrb[0].mxu0
  %v334 = vpop.f32.mrb[0].mxu0
  %335 = vdwg.mxu0
  %v336 = vxor.u32 %v331, 2147483648
  %v337 = vmul.f32 %v336, 1.442695
  %v338 = vpow.pop %v337
  %v339 = vadd.f32 %v338, 1.0
  %v340 = vrcp.pop %v339
  %v341 = vmul.f32 1.0, %v340
  %vm342 = vcmask 122880
  %343 = vst.msk [vmem:[%s10] sm:$0x1] %vm342, %v341
  // Predicated region
  $region42: #{attention_layer_pallas.1} parent=0 // pred_check
    _
  $region43: #{attention_layer_pallas.1} parent=0 // pred_check_branch
    %345 = sbr.rel (0) target = $region45
  $region44: #{attention_layer_pallas.1} parent=0 // pred_region
    _
  $region45: #{attention_layer_pallas.1} parent=0 // pred_fallthru
    _
  // Predicated region
  $region46: #{attention_layer_pallas.1} parent=0 // pred_check
    _
  $region47: #{attention_layer_pallas.1} parent=0 // pred_check_branch
    %347 = sbr.rel (0) target = $region49
  $region48: #{attention_layer_pallas.1} parent=0 // pred_region
    _
  $region49: #{attention_layer_pallas.1} parent=0 // pred_fallthru
    _

</llo_original>
